<compile_context>
chip_gen: v5e
topology: v5e:2x2
jax: 0.10.0
libtpu: 0.0.40
codegen_flags: <defaults>
</compile_context>

<pallas_src>
import jax
import jax.numpy as jnp
from jax.experimental import pallas as pl
from jax.experimental.pallas import tpu as pltpu

_LANE_CANDIDATES = (512, 256, 128)     # lane-dense slab widths (multiples of 128)
_TARGET_TILE_BYTES = 4 * 1024 * 1024   # per array, per pipeline buffer
_MIN_GRID_STEPS = 4                    # pipeline overlap + both v7x TensorCores
_GRID_SPLIT_BYTES = 4 * 1024 * 1024    # only force multi-step grids above this
_VMEM_LIMIT_BYTES = 40 * 1024 * 1024   # > 24 MiB pipeline, < 64 MiB v7x physical


def _vote_kernel(w_ref, mean_ref, vote_ref, out_ref):
    # w_ref:    SMEM f32[1] scalar "weights" parameter
    # mean_ref: VMEM (tile_m, lane) tile of one_hot_mean (HBM dtype)
    # vote_ref: VMEM (tile_m, lane) tile of one_hot_vote (HBM dtype)
    # out_ref:  VMEM (tile_m, lane) tile in the promoted output dtype
    dt = out_ref.dtype
    w = w_ref[0].astype(dt)
    out_ref[...] = w * mean_ref[...].astype(dt) + vote_ref[...].astype(dt)


def _choose_lane(total):
    """Largest lane width that divides `total`; else 128-aligned prefix."""
    for lane in _LANE_CANDIDATES:
        if total % lane == 0:
            return lane, total                 # no tail
    lane = _LANE_CANDIDATES[-1]
    return lane, (total // lane) * lane        # aligned prefix; tail via jnp


def _choose_tile_rows(rows, lane, itemsizes, slab_bytes):
    """Byte-budgeted row tile; guarantees >= _MIN_GRID_STEPS for big arrays."""
    if rows <= 8:
        return rows  # block == full array dims -> satisfies (8,128) rule
    budget_rows = max(8, (_TARGET_TILE_BYTES // (lane * max(itemsizes))) // 8 * 8)
    tile_m = min(budget_rows, (rows // 8) * 8)
    if slab_bytes >= _GRID_SPLIT_BYTES and rows >= _MIN_GRID_STEPS * 8:
        tile_m = min(tile_m, max(8, (rows // _MIN_GRID_STEPS) // 8 * 8))
    return tile_m


def _vote_pallas_2d(weights_f32, mean_2d, vote_2d, out_dtype, tile_m, lane):
    rows = mean_2d.shape[0]
    itemsizes = (jnp.dtype(mean_2d.dtype).itemsize,
                 jnp.dtype(vote_2d.dtype).itemsize,
                 jnp.dtype(out_dtype).itemsize)
    n = rows * lane
    cost = pl.CostEstimate(flops=2 * n, transcendentals=0,
                           bytes_accessed=n * sum(itemsizes))
    # Donate the vote buffer as the output when dtypes match (free win).
    io_aliases = {2: 0} if vote_2d.dtype == jnp.dtype(out_dtype) else {}
    return pl.pallas_call(
        _vote_kernel,
        out_shape=jax.ShapeDtypeStruct((rows, lane), out_dtype),
        grid=(pl.cdiv(rows, tile_m),),
        in_specs=[
            pl.BlockSpec(memory_space=pltpu.MemorySpace.SMEM),    # scalar weight
            pl.BlockSpec((tile_m, lane), lambda i: (i, 0)),       # one_hot_mean
            pl.BlockSpec((tile_m, lane), lambda i: (i, 0)),       # one_hot_vote
        ],
        out_specs=pl.BlockSpec((tile_m, lane), lambda i: (i, 0)),
        compiler_params=pltpu.CompilerParams(
            dimension_semantics=("parallel",),
            vmem_limit_bytes=_VMEM_LIMIT_BYTES),
        cost_estimate=cost,
        input_output_aliases=io_aliases,
    )(weights_f32, mean_2d, vote_2d)


def vote_module_forward(weights, one_hot_mean, one_hot_vote):
    """weights: f32[1]; one_hot_mean / one_hot_vote: same-shape arrays (NCHW)."""
    assert one_hot_mean.shape == one_hot_vote.shape
    orig_shape = one_hot_mean.shape

    # PyTorch-style promotion: float32 parameter * input dtypes.
    out_dtype = jnp.promote_types(
        jnp.promote_types(jnp.float32, one_hot_mean.dtype), one_hot_vote.dtype)
    w_f32 = weights.astype(jnp.float32).reshape(1)

    total = one_hot_mean.size
    if total == 0:
        return jnp.zeros(orig_shape, out_dtype)

    lane, n_main = _choose_lane(total)
    mean_f = one_hot_mean.reshape(-1)
    vote_f = one_hot_vote.reshape(-1)

    if n_main == 0:
        # Tiny lane-unaligned input: plain jnp is cheaper than any kernel.
        out = (w_f32[0].astype(out_dtype) * mean_f.astype(out_dtype)
               + vote_f.astype(out_dtype))
        return out.reshape(orig_shape)

    rows = n_main // lane
    mean_2d = (mean_f if n_main == total else mean_f[:n_main]).reshape(rows, lane)
    vote_2d = (vote_f if n_main == total else vote_f[:n_main]).reshape(rows, lane)

    itemsizes = (jnp.dtype(mean_2d.dtype).itemsize,
                 jnp.dtype(vote_2d.dtype).itemsize,
                 jnp.dtype(out_dtype).itemsize)
    slab_bytes = n_main * max(itemsizes)
    tile_m = _choose_tile_rows(rows, lane, itemsizes, slab_bytes)

    out_2d = _vote_pallas_2d(w_f32, mean_2d, vote_2d, out_dtype, tile_m, lane)
    out = out_2d.reshape(-1)

    if n_main != total:
        # <128-element tail handled in the wrapper (rare for NCHW one-hots).
        tail = (w_f32[0].astype(out_dtype) * mean_f[n_main:].astype(out_dtype)
                + vote_f[n_main:].astype(out_dtype))
        out = jnp.concatenate([out, tail])

    return out.reshape(orig_shape)


if __name__ == "__main__":
    key = jax.random.PRNGKey(0)
    k_mean, k_vote = jax.random.split(key)

    # Small shapes consistent with a one-hot segmentation vote: (B, C, H, W)
    B, C, H, W = 2, 4, 16, 16
    one_hot_mean = jax.random.uniform(k_mean, (B, C, H, W), dtype=jnp.float32)
    one_hot_vote = jax.random.uniform(k_vote, (B, C, H, W), dtype=jnp.float32)

    # Deterministic parameter init, matching nn.Parameter(torch.ones(1) * 5)
    weights = jnp.ones((1,), dtype=jnp.float32) * 5.0

    out = vote_module_forward(weights, one_hot_mean, one_hot_vote)
    out = jax.block_until_ready(out)

    ref = weights[0] * one_hot_mean + one_hot_vote
    assert out.shape == ref.shape
    assert out.dtype == ref.dtype
    assert jnp.allclose(out, ref, atol=1e-6, rtol=1e-6)

    print("KERNEL_OK")
</pallas_src>

<mosaic_0001>
module attributes {stable_mosaic.version = 11 : i64} {
  func.func @_vote_kernel(%arg0: i32, %arg1: memref<1xf32, #tpu.memory_space<smem>>, %arg2: memref<4x512xf32, #tpu.memory_space<vmem>>, %arg3: memref<4x512xf32, #tpu.memory_space<vmem>>, %arg4: memref<4x512xf32, #tpu.memory_space<vmem>>) attributes {dimension_semantics = [#tpu.dimension_semantics<parallel>], iteration_bounds = array<i64: 1>, scalar_prefetch = 0 : i64, scratch_operands = 0 : i64, tpu.core_type = #tpu.core_type<tc>, window_params = [{transform_indices = @transform_0, window_bounds = array<i64: 1>}, {transform_indices = @transform_1, window_bounds = array<i64: 4, 512>}, {transform_indices = @transform_2, window_bounds = array<i64: 4, 512>}, {transform_indices = @transform_3, window_bounds = array<i64: 4, 512>}]} {
    %c0 = arith.constant 0 : index
    %0 = memref.load %arg1[%c0] : memref<1xf32, #tpu.memory_space<smem>>
    %c0_0 = arith.constant 0 : index
    %c0_1 = arith.constant 0 : index
    %1 = vector.load %arg2[%c0_0, %c0_1] : memref<4x512xf32, #tpu.memory_space<vmem>>, vector<4x512xf32>
    %2 = vector.broadcast %0 : f32 to vector<4x512xf32>
    %3 = arith.mulf %2, %1 : vector<4x512xf32>
    %c0_2 = arith.constant 0 : index
    %c0_3 = arith.constant 0 : index
    %4 = vector.load %arg3[%c0_2, %c0_3] : memref<4x512xf32, #tpu.memory_space<vmem>>, vector<4x512xf32>
    %5 = arith.addf %3, %4 : vector<4x512xf32>
    %c0_4 = arith.constant 0 : index
    %c0_5 = arith.constant 0 : index
    %6 = vector.load %arg4[%c0_4, %c0_5] : memref<4x512xf32, #tpu.memory_space<vmem>>, vector<4x512xf32>
    tpu.vector_store %arg4[%c0_4, %c0_5], %5 {strides = array<i32>} : memref<4x512xf32, #tpu.memory_space<vmem>>, vector<4x512xf32>,
    return
  }
  func.func @transform_0(%arg0: i32) -> i32 {
    %c0_i32 = arith.constant 0 : i32
    %c0_i32_0 = arith.constant 0 : i32
    return %c0_i32 : i32
  }
  func.func @transform_1(%arg0: i32) -> (i32, i32) {
    %c0_i32 = arith.constant 0 : i32
    %c0_i32_0 = arith.constant 0 : i32
    return %arg0, %c0_i32 : i32, i32
  }
  func.func @transform_2(%arg0: i32) -> (i32, i32) {
    %c0_i32 = arith.constant 0 : i32
    %c0_i32_0 = arith.constant 0 : i32
    return %arg0, %c0_i32 : i32, i32
  }
  func.func @transform_3(%arg0: i32) -> (i32, i32) {
    %c0_i32 = arith.constant 0 : i32
    %c0_i32_0 = arith.constant 0 : i32
    return %arg0, %c0_i32 : i32, i32
  }
}

</mosaic_0001>

<llo_original>
// kernel: tpu_custom_call.1
$region0: #{tpu_custom_call.1}
  #allocation0 [shape = 'u32[]', space=smem, size = 0x4, offset = 0x4, fixed_abs, tag = 'smem constant byte address 0x4 - core index']
  #allocation1 [shape = 'u32[72,128]{1,0:T(1,128)}', space=vmem, size = 0x9000, scoped, tag = 'internal scratch']
  #allocation2 [shape = 'f32[1]{0:T(128)S(6)}', space=smem, size = 0x200, scoped, tag = 'scoped memory for tpu_custom_call.1']
  %s0 = inlined_call_operand.<no memory space> [shape: f32[1], index: 0, kind: input, shape index: {}]
  %s1 = inlined_call_operand.vmem [shape: f32[4,512], index: 1, kind: input, shape index: {}]
  %s2 = inlined_call_operand.hbm [shape: f32[4,512], index: 2, kind: input, shape index: {}, may-alias: {2,3}]
  %s3 = inlined_call_operand.hbm [shape: f32[4,512], index: 3, kind: output, shape index: {}, may-alias: {2,3}]
  %s4 = sld [smem:[#allocation0]]
  $region26: #{tpu_custom_call.1} parent=0
    _
  %s6 = ssub.s32 1, %s4
  %s7 = scalar_select 0, %s6, %s4
  %8 = sst [smem:[#allocation2]] %s0
  $region1: #{tpu_custom_call.1} parent=0
    #allocation3 [shape = 'u8[8192]{0}', space=vmem, size = 0x2000, scoped, tag = 'input window, operand 2, single buffered']
    #allocation4 [shape = 's32[1]{0}', space=sflag, size = 0x4, scoped, tag = 'scoped memory for tpu_custom_call.1']
    #allocation5 [shape = 's32[1]{0}', space=sflag, size = 0x4, scoped, tag = 'scoped memory for tpu_custom_call.1']
    #allocation6 [shape = 'u8[8192]{0}', space=vmem, size = 0x2000, scoped, tag = 'output window, operand 0, single buffered']
    %9 = vsyncpa [#allocation4], 0
    %10 = vsyncpa [#allocation5], 0
    // Predicated region
    $region2: #{tpu_custom_call.1} parent=1 // pred_check
      _
    $region3: #{tpu_custom_call.1} parent=1 // pred_check_branch
      %12 = sbr.rel (0) target = $region5
    $region4: #{tpu_custom_call.1} parent=1 // pred_region
      _
    $region5: #{tpu_custom_call.1} parent=1 // pred_fallthru
      _
    // Predicated region
    $region6: #{tpu_custom_call.1} parent=1 // pred_check
      _
    $region7: #{tpu_custom_call.1} parent=1 // pred_check_branch
      %14 = sbr.rel (0) target = $region9
    $region8: #{tpu_custom_call.1} parent=1 // pred_region
      _
    $region9: #{tpu_custom_call.1} parent=1 // pred_fallthru
      _
    // Predicated region
    $region10: #{tpu_custom_call.1} parent=1 // pred_check
      _
    $region11: #{tpu_custom_call.1} parent=1 // pred_check_branch
      %16 = sbr.rel (0) target = $region13
    $region12: #{tpu_custom_call.1} parent=1 // pred_region
      %18 = vsyncadd [#allocation4], 0
      %s20 = sshll.u32 %s2, 4
      %s21 = int_to_ptr.hbm [resolvable:$true] %s20
      %s22 = sshll.u32 [#allocation3], 4
      %s23 = int_to_ptr.vmem [resolvable:$true] %s22
      %25 = dma.hbm_to_vmem [thread:$0]  %s21, 256, %s23, [#allocation4]
    $region13: #{tpu_custom_call.1} parent=1 // pred_fallthru
      _
    // Predicated region
    $region14: #{tpu_custom_call.1} parent=1 // pred_check
      _
    $region15: #{tpu_custom_call.1} parent=1 // pred_check_branch
      %27 = sbr.rel (0) target = $region17
    $region16: #{tpu_custom_call.1} parent=1 // pred_region
      %29 = dma.done [#allocation4], 256
    $region17: #{tpu_custom_call.1} parent=1 // pred_fallthru
      _
    %s30 = sld [smem:[#allocation2]]
    %v31 = vld [vmem:[%s1] sm:$0xff]
    %v32 = vld [vmem:[%s1 + $0x8] sm:$0xff]
    %v33 = vstv %s30
    %v34 = vmul.f32 %v33, %v31
    %v35 = vmul.f32 %v33, %v32
    %v36 = vld [vmem:[#allocation3] sm:$0xff]
    %v37 = vld [vmem:[#allocation3 + $0x8] sm:$0xff]
    %v38 = vadd.f32 %v34, %v36
    %v39 = vadd.f32 %v35, %v37
    %40 = vst [vmem:[#allocation6] sm:$0xff] %v38
    %41 = vst [vmem:[#allocation6 + $0x8] sm:$0xff] %v39
    // Predicated region
    $region18: #{tpu_custom_call.1} parent=1 // pred_check
      _
    $region19: #{tpu_custom_call.1} parent=1 // pred_check_branch
      %43 = sbr.rel (0) target = $region21
    $region20: #{tpu_custom_call.1} parent=1 // pred_region
      %45 = vsyncadd [#allocation5], 0
      %s47 = sshll.u32 [#allocation6], 4
      %s48 = int_to_ptr.vmem [resolvable:$true] %s47
      %s49 = sshll.u32 %s3, 4
      %s50 = int_to_ptr.hbm [resolvable:$true] %s49
      %52 = dma.vmem_to_hbm [thread:$0]  %s48, 256, %s50, [#allocation5]
    $region21: #{tpu_custom_call.1} parent=1 // pred_fallthru
      _
    // Predicated region
    $region22: #{tpu_custom_call.1} parent=1 // pred_check
      _
    $region23: #{tpu_custom_call.1} parent=1 // pred_check_branch
      %54 = sbr.rel (0) target = $region25
    $region24: #{tpu_custom_call.1} parent=1 // pred_region
      %56 = dma.done [#allocation5], 256
    $region25: #{tpu_custom_call.1} parent=1 // pred_fallthru
      _
    %57 = vsyncpa [#allocation4], 1
    %58 = vsyncpa [#allocation5], 1

</llo_original>
